<compile_context>
chip_gen: v6e
topology: v6e:2x2x1
jax: 0.10.0
libtpu: 0.0.40
codegen_flags: <defaults>
</compile_context>

<pallas_src>
import math

import jax
import jax.numpy as jnp
from jax import lax
from jax.experimental import pallas as pl
from jax.experimental.pallas import tpu as pltpu

_TWO_PI = 6.283185307179586


def _dropout_randn_kernel(x_ref, b1_ref, b2_ref, y_ref, t2_ref, t1_ref):
    x = x_ref[...]
    b1 = b1_ref[...]
    b2 = b2_ref[...]

    # ---- dropout(p=0.5), training mode: keep w/ prob 0.5, scale by 1/(1-p) = 2 ----
    # Bit 8 of b1 is discarded by the >>9 shift below, so this mask is independent
    # of the normals and we avoid a separate bits draw.  Single select, no converts.
    keep = (b1 & jnp.uint32(0x100)) != jnp.uint32(0)
    y_ref[...] = jnp.where(keep, x + x, jnp.float32(0.0))

    # x2 = F.dropout(x1) in the reference module is dead code -> not materialized.

    # ---- t1, t2 = randn_like(x1): one Box-Muller pair ----
    # Exponent bit-trick: (bits >> 9) | 0x3f800000 reinterpreted as f32 is in [1, 2).
    f1 = lax.bitcast_convert_type((b1 >> 9) | jnp.uint32(0x3F800000), jnp.float32)
    f2 = lax.bitcast_convert_type((b2 >> 9) | jnp.uint32(0x3F800000), jnp.float32)
    u1 = jnp.float32(2.0) - f1                               # (0, 1]  -> log(u1) finite
    theta = jnp.float32(_TWO_PI) * (f2 - jnp.float32(1.0))   # [0, 2*pi)
    r = jnp.sqrt(jnp.float32(-2.0) * jnp.log(u1))
    t1_ref[...] = r * jnp.cos(theta)
    t2_ref[...] = r * jnp.sin(theta)


def _pick_block_rows(M, D):
    # Keep each f32 block <= ~2 MiB so all six double-buffered blocks fit easily in
    # v7x's 32 MiB scoped VMEM (and trivially on v5e/v6e).
    target = max(8, (2 * 1024 * 1024) // (4 * D))
    for cand in (4096, 2048, 1024, 512, 256, 128, 64, 32, 16, 8):
        if cand <= target and M % cand == 0:
            return cand
    return M  # tiny / ragged M: one full-extent block (exempt from the (8,128) rule)


def model_forward(x, key):
    """Returns (x1_dropped, t2, t1) matching the PyTorch module's output tuple."""
    orig_shape = x.shape
    D = orig_shape[-1]
    M = math.prod(orig_shape[:-1])
    x2d = x.reshape(M, D)

    # TODO(synk): torch's global RNG state has no direct equivalent; randomness comes
    # from a JAX key (bits drawn here, transformed inside the kernel).
    k1, k2 = jax.random.split(key)
    b1 = jax.random.bits(k1, (M, D), dtype=jnp.uint32)
    b2 = jax.random.bits(k2, (M, D), dtype=jnp.uint32)

    bm = _pick_block_rows(M, D)
    grid = (M // bm,)
    blk = lambda: pl.BlockSpec((bm, D), lambda i: (i, 0))

    out_sds = jax.ShapeDtypeStruct((M, D), jnp.float32)
    y, t2, t1 = pl.pallas_call(
        _dropout_randn_kernel,
        grid=grid,
        in_specs=[blk(), blk(), blk()],           # x, bits1, bits2
        out_specs=(blk(), blk(), blk()),          # x1_dropped, t2, t1
        out_shape=(out_sds, out_sds, out_sds),
        compiler_params=pltpu.CompilerParams(
            dimension_semantics=("parallel",)),   # shard rows across v7x's 2 TCs
    )(x2d, b1, b2)

    return (y.reshape(orig_shape),
            t2.reshape(orig_shape),
            t1.reshape(orig_shape))


if __name__ == "__main__":
    key = jax.random.PRNGKey(0)
    xkey, rkey = jax.random.split(key)
    B, S, D = 2, 8, 128
    x = jax.random.normal(xkey, (B, S, D), dtype=jnp.float32)

    y, t2, t1 = model_forward(x, rkey)
    jax.block_until_ready((y, t2, t1))

    # dropout semantics: each output element is either 0 or 2*x
    zero_or_scaled = jnp.logical_or(y == 0.0, jnp.isclose(y, 2.0 * x))
    assert bool(jnp.all(zero_or_scaled))
    assert y.shape == t1.shape == t2.shape == x.shape
    assert y.dtype == t1.dtype == t2.dtype == jnp.float32
    assert bool(jnp.all(jnp.isfinite(t1))) and bool(jnp.all(jnp.isfinite(t2)))

    print("KERNEL_OK")
</pallas_src>

<mosaic_0001>
module attributes {stable_mosaic.version = 11 : i64} {
  func.func @_dropout_randn_kernel(%arg0: i32, %arg1: memref<16x128xf32, #tpu.memory_space<vmem>>, %arg2: memref<16x128xi32, #tpu.memory_space<vmem>>, %arg3: memref<16x128xi32, #tpu.memory_space<vmem>>, %arg4: memref<16x128xf32, #tpu.memory_space<vmem>>, %arg5: memref<16x128xf32, #tpu.memory_space<vmem>>, %arg6: memref<16x128xf32, #tpu.memory_space<vmem>>) attributes {dimension_semantics = [#tpu.dimension_semantics<parallel>], iteration_bounds = array<i64: 1>, scalar_prefetch = 0 : i64, scratch_operands = 0 : i64, tpu.core_type = #tpu.core_type<tc>, window_params = [{transform_indices = @transform_0, window_bounds = array<i64: 16, 128>}, {transform_indices = @transform_1, window_bounds = array<i64: 16, 128>}, {transform_indices = @transform_2, window_bounds = array<i64: 16, 128>}, {transform_indices = @transform_3, window_bounds = array<i64: 16, 128>}, {transform_indices = @transform_4, window_bounds = array<i64: 16, 128>}, {transform_indices = @transform_5, window_bounds = array<i64: 16, 128>}]} {
    %c0 = arith.constant 0 : index
    %c0_0 = arith.constant 0 : index
    %0 = vector.load %arg1[%c0, %c0_0] : memref<16x128xf32, #tpu.memory_space<vmem>>, vector<16x128xf32>
    %c0_1 = arith.constant 0 : index
    %c0_2 = arith.constant 0 : index
    %1 = vector.load %arg2[%c0_1, %c0_2] : memref<16x128xi32, #tpu.memory_space<vmem>>, vector<16x128xi32>
    %c0_3 = arith.constant 0 : index
    %c0_4 = arith.constant 0 : index
    %2 = vector.load %arg3[%c0_3, %c0_4] : memref<16x128xi32, #tpu.memory_space<vmem>>, vector<16x128xi32>
    %c256_i32 = arith.constant 256 : i32
    %3 = vector.broadcast %c256_i32 : i32 to vector<16x128xi32>
    %4 = arith.andi %1, %3 : vector<16x128xi32>
    %c0_i32 = arith.constant 0 : i32
    %5 = vector.broadcast %c0_i32 : i32 to vector<16x128xi32>
    %6 = arith.cmpi ne, %4, %5 : vector<16x128xi32>
    %7 = arith.addf %0, %0 : vector<16x128xf32>
    %cst = arith.constant 0.000000e+00 : f32
    %8 = vector.broadcast %cst : f32 to vector<16x128xf32>
    %9 = arith.select %6, %7, %8 : vector<16x128xi1>, vector<16x128xf32>
    %c0_5 = arith.constant 0 : index
    %c0_6 = arith.constant 0 : index
    %10 = vector.load %arg4[%c0_5, %c0_6] : memref<16x128xf32, #tpu.memory_space<vmem>>, vector<16x128xf32>
    tpu.vector_store %arg4[%c0_5, %c0_6], %9 {strides = array<i32>} : memref<16x128xf32, #tpu.memory_space<vmem>>, vector<16x128xf32>,
    %c9_i32 = arith.constant 9 : i32
    %11 = vector.broadcast %c9_i32 : i32 to vector<16x128xi32>
    %12 = arith.shrui %1, %11 : vector<16x128xi32>
    %c1065353216_i32 = arith.constant 1065353216 : i32
    %13 = vector.broadcast %c1065353216_i32 : i32 to vector<16x128xi32>
    %14 = arith.ori %12, %13 : vector<16x128xi32>
    %15 = tpu.bitcast %14 : vector<16x128xi32> -> vector<16x128xf32>
    %c9_i32_7 = arith.constant 9 : i32
    %16 = vector.broadcast %c9_i32_7 : i32 to vector<16x128xi32>
    %17 = arith.shrui %2, %16 : vector<16x128xi32>
    %c1065353216_i32_8 = arith.constant 1065353216 : i32
    %18 = vector.broadcast %c1065353216_i32_8 : i32 to vector<16x128xi32>
    %19 = arith.ori %17, %18 : vector<16x128xi32>
    %20 = tpu.bitcast %19 : vector<16x128xi32> -> vector<16x128xf32>
    %cst_9 = arith.constant 2.000000e+00 : f32
    %21 = vector.broadcast %cst_9 : f32 to vector<16x128xf32>
    %22 = arith.subf %21, %15 : vector<16x128xf32>
    %cst_10 = arith.constant 1.000000e+00 : f32
    %23 = vector.broadcast %cst_10 : f32 to vector<16x128xf32>
    %24 = arith.subf %20, %23 : vector<16x128xf32>
    %cst_11 = arith.constant 6.28318548 : f32
    %25 = vector.broadcast %cst_11 : f32 to vector<16x128xf32>
    %26 = arith.mulf %25, %24 : vector<16x128xf32>
    %27 = math.log %22 : vector<16x128xf32>
    %cst_12 = arith.constant -2.000000e+00 : f32
    %28 = vector.broadcast %cst_12 : f32 to vector<16x128xf32>
    %29 = arith.mulf %28, %27 : vector<16x128xf32>
    %30 = math.sqrt %29 : vector<16x128xf32>
    %31 = math.cos %26 : vector<16x128xf32>
    %32 = arith.mulf %30, %31 : vector<16x128xf32>
    %c0_13 = arith.constant 0 : index
    %c0_14 = arith.constant 0 : index
    %33 = vector.load %arg6[%c0_13, %c0_14] : memref<16x128xf32, #tpu.memory_space<vmem>>, vector<16x128xf32>
    tpu.vector_store %arg6[%c0_13, %c0_14], %32 {strides = array<i32>} : memref<16x128xf32, #tpu.memory_space<vmem>>, vector<16x128xf32>,
    %34 = math.sin %26 : vector<16x128xf32>
    %35 = arith.mulf %30, %34 : vector<16x128xf32>
    %c0_15 = arith.constant 0 : index
    %c0_16 = arith.constant 0 : index
    %36 = vector.load %arg5[%c0_15, %c0_16] : memref<16x128xf32, #tpu.memory_space<vmem>>, vector<16x128xf32>
    tpu.vector_store %arg5[%c0_15, %c0_16], %35 {strides = array<i32>} : memref<16x128xf32, #tpu.memory_space<vmem>>, vector<16x128xf32>,
    return
  }
  func.func @transform_0(%arg0: i32) -> (i32, i32) {
    %c0_i32 = arith.constant 0 : i32
    %c0_i32_0 = arith.constant 0 : i32
    return %arg0, %c0_i32 : i32, i32
  }
  func.func @transform_1(%arg0: i32) -> (i32, i32) {
    %c0_i32 = arith.constant 0 : i32
    %c0_i32_0 = arith.constant 0 : i32
    return %arg0, %c0_i32 : i32, i32
  }
  func.func @transform_2(%arg0: i32) -> (i32, i32) {
    %c0_i32 = arith.constant 0 : i32
    %c0_i32_0 = arith.constant 0 : i32
    return %arg0, %c0_i32 : i32, i32
  }
  func.func @transform_3(%arg0: i32) -> (i32, i32) {
    %c0_i32 = arith.constant 0 : i32
    %c0_i32_0 = arith.constant 0 : i32
    return %arg0, %c0_i32 : i32, i32
  }
  func.func @transform_4(%arg0: i32) -> (i32, i32) {
    %c0_i32 = arith.constant 0 : i32
    %c0_i32_0 = arith.constant 0 : i32
    return %arg0, %c0_i32 : i32, i32
  }
  func.func @transform_5(%arg0: i32) -> (i32, i32) {
    %c0_i32 = arith.constant 0 : i32
    %c0_i32_0 = arith.constant 0 : i32
    return %arg0, %c0_i32 : i32, i32
  }
}

</mosaic_0001>

<llo_original>
// kernel: tpu_custom_call.1
$region0: #{tpu_custom_call.1}
  #allocation0 [shape = 'u32[]', space=smem, size = 0x4, offset = 0x4, fixed_abs, tag = 'smem constant byte address 0x4 - core index']
  #allocation1 [shape = 'u32[144,128]{1,0:T(1,128)}', space=vmem, size = 0x12000, scoped, tag = 'internal scratch']
  %s0 = inlined_call_operand.hbm [shape: f32[16,128], index: 0, kind: input, shape index: {}]
  %s1 = inlined_call_operand.hbm [shape: u32[16,128], index: 1, kind: input, shape index: {}]
  %s2 = inlined_call_operand.hbm [shape: u32[16,128], index: 2, kind: input, shape index: {}]
  %s3 = inlined_call_operand.hbm [shape: f32[16,128], index: 3, kind: output, shape index: {0}]
  %s4 = inlined_call_operand.hbm [shape: f32[16,128], index: 4, kind: output, shape index: {1}]
  %s5 = inlined_call_operand.hbm [shape: f32[16,128], index: 5, kind: output, shape index: {2}]
  %6 = xla_tuple %s3, %s4, %s5
  %s7 = sld [smem:[#allocation0]]
  $region50: #{tpu_custom_call.1} parent=0
    _
  %s9 = ssub.s32 1, %s7
  %s10 = scalar_select 0, %s9, %s7
  $region1: #{tpu_custom_call.1} parent=0
    #allocation2 [shape = 'u8[8192]{0}', space=vmem, size = 0x2000, scoped, tag = 'input window, operand 0, single buffered']
    #allocation3 [shape = 's32[1]{0}', space=sflag, size = 0x4, scoped, tag = 'scoped memory for tpu_custom_call.1']
    #allocation4 [shape = 's32[1]{0}', space=sflag, size = 0x4, scoped, tag = 'scoped memory for tpu_custom_call.1']
    #allocation5 [shape = 'u8[8192]{0}', space=vmem, size = 0x2000, scoped, tag = 'input window, operand 1, single buffered']
    #allocation6 [shape = 's32[1]{0}', space=sflag, size = 0x4, scoped, tag = 'scoped memory for tpu_custom_call.1']
    #allocation7 [shape = 'u8[8192]{0}', space=vmem, size = 0x2000, scoped, tag = 'input window, operand 2, single buffered']
    #allocation8 [shape = 'u8[8192]{0}', space=vmem, size = 0x2000, scoped, tag = 'output window, operand 0, single buffered']
    #allocation9 [shape = 'u8[8192]{0}', space=vmem, size = 0x2000, scoped, tag = 'output window, operand 1, single buffered']
    #allocation10 [shape = 's32[1]{0}', space=sflag, size = 0x4, scoped, tag = 'scoped memory for tpu_custom_call.1']
    #allocation11 [shape = 'u8[8192]{0}', space=vmem, size = 0x2000, scoped, tag = 'output window, operand 2, single buffered']
    %11 = vsyncpa [#allocation3], 0
    %12 = vsyncpa [#allocation6], 0
    %13 = vsyncpa [#allocation4], 0
    %14 = vsyncpa [#allocation10], 0
    // Predicated region
    $region2: #{tpu_custom_call.1} parent=1 // pred_check
      _
    $region3: #{tpu_custom_call.1} parent=1 // pred_check_branch
      %16 = sbr.rel (0) target = $region5
    $region4: #{tpu_custom_call.1} parent=1 // pred_region
      %s18 = ssub.s32 256, 256
      %19 = vsyncadd [#allocation3], %s18
      %s20 = sshll.u32 [#allocation2], 4
      %s21 = int_to_ptr.vmem [resolvable:$true] %s20
      %26 = dma.hbm_to_vmem [thread:$0]  %s0, 256, %s21, [#allocation3], 128, 128, 8
    $region5: #{tpu_custom_call.1} parent=1 // pred_fallthru
      _
    // Predicated region
    $region6: #{tpu_custom_call.1} parent=1 // pred_check
      _
    $region7: #{tpu_custom_call.1} parent=1 // pred_check_branch
      %28 = sbr.rel (0) target = $region9
    $region8: #{tpu_custom_call.1} parent=1 // pred_region
      %s30 = ssub.s32 256, 256
      %31 = vsyncadd [#allocation6], %s30
      %s32 = sshll.u32 [#allocation5], 4
      %s33 = int_to_ptr.vmem [resolvable:$true] %s32
      %38 = dma.hbm_to_vmem [thread:$0]  %s1, 256, %s33, [#allocation6], 128, 128, 8
    $region9: #{tpu_custom_call.1} parent=1 // pred_fallthru
      _
    // Predicated region
    $region10: #{tpu_custom_call.1} parent=1 // pred_check
      _
    $region11: #{tpu_custom_call.1} parent=1 // pred_check_branch
      %40 = sbr.rel (0) target = $region13
    $region12: #{tpu_custom_call.1} parent=1 // pred_region
      %s42 = ssub.s32 256, 256
      %43 = vsyncadd [#allocation6], %s42
      %s44 = sshll.u32 [#allocation7], 4
      %s45 = int_to_ptr.vmem [resolvable:$true] %s44
      %50 = dma.hbm_to_vmem [thread:$0]  %s2, 256, %s45, [#allocation6], 128, 128, 8
    $region13: #{tpu_custom_call.1} parent=1 // pred_fallthru
      _
    // Predicated region
    $region14: #{tpu_custom_call.1} parent=1 // pred_check
      _
    $region15: #{tpu_custom_call.1} parent=1 // pred_check_branch
      %52 = sbr.rel (0) target = $region17
    $region16: #{tpu_custom_call.1} parent=1 // pred_region
      %53 = dma.done [#allocation3], 256
    $region17: #{tpu_custom_call.1} parent=1 // pred_fallthru
      _
    // Predicated region
    $region18: #{tpu_custom_call.1} parent=1 // pred_check
      _
    $region19: #{tpu_custom_call.1} parent=1 // pred_check_branch
      %55 = sbr.rel (0) target = $region21
    $region20: #{tpu_custom_call.1} parent=1 // pred_region
      %56 = dma.done [#allocation6], 256
    $region21: #{tpu_custom_call.1} parent=1 // pred_fallthru
      _
    // Predicated region
    $region22: #{tpu_custom_call.1} parent=1 // pred_check
      _
    $region23: #{tpu_custom_call.1} parent=1 // pred_check_branch
      %58 = sbr.rel (0) target = $region25
    $region24: #{tpu_custom_call.1} parent=1 // pred_region
      %59 = dma.done [#allocation6], 256
    $region25: #{tpu_custom_call.1} parent=1 // pred_fallthru
      _
    %v60 = vld [vmem:[#allocation2] sm:$0xff]
    %v61 = vld [vmem:[#allocation2 + $0x8] sm:$0xff]
    %v62 = vld [vmem:[#allocation5] sm:$0xff]
    %v63 = vld [vmem:[#allocation5 + $0x8] sm:$0xff]
    %v64 = vld [vmem:[#allocation7] sm:$0xff]
    %v65 = vld [vmem:[#allocation7 + $0x8] sm:$0xff]
    %v66 = vand.u32 %v62, 256
    %v67 = vand.u32 %v63, 256
    %vm68 = vcmp.ne.s32.totalorder %v66, 0
    %vm69 = vcmp.ne.s32.totalorder %v67, 0
    %v70 = vadd.f32 %v60, %v60
    %v71 = vadd.f32 %v61, %v61
    %v72 = vsel %vm68, %v70, 0.0
    %v73 = vsel %vm69, %v71, 0.0
    %74 = vst [vmem:[#allocation8] sm:$0xff] %v72
    %75 = vst [vmem:[#allocation8 + $0x8] sm:$0xff] %v73
    %v76 = vshrl.u32 %v62, 9
    %v77 = vshrl.u32 %v63, 9
    %v78 = vor.u32 %v76, 1065353216
    %v79 = vor.u32 %v77, 1065353216
    %v82 = vshrl.u32 %v64, 9
    %v83 = vshrl.u32 %v65, 9
    %v84 = vor.u32 %v82, 1065353216
    %v85 = vor.u32 %v83, 1065353216
    %v88 = vsub.f32 2.0, %v78
    %v89 = vsub.f32 2.0, %v79
    %v90 = vsub.f32 %v84, 1.0
    %v91 = vsub.f32 %v85, 1.0
    %v92 = vmul.f32 %v90, 6.2831855
    %v93 = vmul.f32 %v91, 6.2831855
    %v94 = vlog2.pop %v88
    %v95 = vmul.f32 %v94, 0.6931472
    %v96 = vlog2.pop %v89
    %v97 = vmul.f32 %v96, 0.6931472
    %v98 = vmul.f32 %v95, -2.0
    %v99 = vmul.f32 %v97, -2.0
    %v100 = vrsqrt.pop %v98
    %v101 = vmul.f32 %v98, %v100
    %vm102 = vcmp.eq.f32.partialorder %v98, inf
    %v103 = vsel %vm102, %v98, %v101
    %vm104 = vcmp.eq.f32.partialorder %v98, 0.0
    %v105 = vand.u32 %v98, 2147483648
    %v106 = vsel %vm104, %v105, %v103
    %v107 = vrsqrt.pop %v99
    %v108 = vmul.f32 %v99, %v107
    %vm109 = vcmp.eq.f32.partialorder %v99, inf
    %v110 = vsel %vm109, %v99, %v108
    %vm111 = vcmp.eq.f32.partialorder %v99, 0.0
    %v112 = vand.u32 %v99, 2147483648
    %v113 = vsel %vm111, %v112, %v110
    %v114 = vand.u32 2147483647, %v92
    %vm115 = vcmp.le.f32.partialorder %v114, 0.7853982
    %vm116 = vcmp.lt.s32.totalorder %v92, 0
    %v117 = vand.u32 %v92, 2139095040
    %v118 = vshrl.u32 %v117, 23
    %v119 = vsub.s32 %v118, 127
    %v120 = vand.u32 2147483647, %v92
    %v121 = vand.u32 %v120, 8388607
    %v122 = vor.u32 %v121, 8388608
    %v123 = vsub.s32 0, %v122
    %v124 = vadd.s32 %v119, 1
    %vm125 = vcmp.gt.s32.totalorder %v124, 0
    %v126 = vsel %vm125, %v124, 0
    %v127 = vshrl.u32 %v126, 5
    %v128 = vand.u32 %v126, 31
    %v129 = vsub.s32 32, %v128
    %v130 = vshrl.u32 683565275, %v129
    %v131 = vshll.u32 683565275, %v128
    %v132 = vshrl.u32 2475754826, %v129
    %v133 = vor.u32 %v131, %v132
    %v134 = vshll.u32 2475754826, %v128
    %v135 = vshrl.u32 2131351028, %v129
    %v136 = vor.u32 %v134, %v135
    %v137 = vshll.u32 2131351028, %v128
    %v138 = vshrl.u32 2102212464, %v129
    %v139 = vor.u32 %v137, %v138
    %v140 = vshll.u32 2102212464, %v128
    %v141 = vshrl.u32 920167782, %v129
    %v142 = vor.u32 %v140, %v141
    %v143 = vshll.u32 920167782, %v128
    %v144 = vshrl.u32 1326507024, %v129
    %v145 = vor.u32 %v143, %v144
    %vm146 = vcmp.lt.s32.totalorder %v127, 1
    %vm147 = vcmp.lt.s32.totalorder %v127, 2
    %vm148 = vcmp.lt.s32.totalorder %v127, 3
    %vm149 = vcmp.lt.s32.totalorder %v127, 4
    %v150 = vsel %vm146, %v130, %v133
    %v151 = vsel %vm149, %v139, 2102212464
    %v152 = vsel %vm148, %v136, %v151
    %v153 = vsel %vm147, %v150, %v152
    %v154 = vsel %vm146, %v133, %v136
    %v155 = vsel %vm149, %v142, 920167782
    %v156 = vsel %vm148, %v139, %v155
    %v157 = vsel %vm147, %v154, %v156
    %v158 = vsel %vm146, %v136, %v139
    %v159 = vsel %vm149, %v145, 1326507024
    %v160 = vsel %vm148, %v142, %v159
    %v161 = vsel %vm147, %v158, %v160
    %v162 = vshll.u32 %v122, 8
    %v163 = vmul.u32.u64.compose %v162, %v161
    %v164 = vextract.low.u32 %v163
    %v165 = vextract.high.u32 %v163
    %v166 = vmul.u32.u64.compose %v162, %v157
    %v167 = vextract.low.u32 %v166
    %v168 = vextract.high.u32 %v166
    %v169 = vmul.u32 %v162, %v153
    %v170 = vadd.s32 %v165, %v167
    %vm171 = vc.u32 %v165, %v167
    %v172 = vadd.s32 %v168, 1
    %v173 = vsel %vm171, %v172, %v168
    %v174 = vadd.s32 %v169, %v173
    %v175 = vadd.s32 %v174, 536870912
    %v176 = vshrl.u32 %v175, 30
    %v177 = vshll.u32 %v176, 30
    %v178 = vsub.s32 %v174, %v177
    %vm179 = vcmp.lt.s32.totalorder %v178, 0
    %v180 = vsub.s32 0, %v178
    %v181 = vsel %vm179, %v180, %v178
    %v182 = vclz %v181
    %v183 = vsub.s32 %v182, 2
    %vm184 = vcmp.gt.s32.totalorder 0, %v183
    %v185 = vsel %vm184, 0, %v183
    %v186 = vsub.s32 32, %v185
    %v187 = vshll.u32 %v178, %v185
    %v188 = vshrl.u32 %v170, %v186
    %v189 = vor.u32 %v187, %v188
    %v190 = vsub.s32 4294967266, %v185
    %v191 = vadd.s32 %v190, 127
    %v192 = vshll.u32 %v191, 23
    %v193 = vor.u32 4788187, %v192
    %v194 = vand.u32 2147483647, %v193
    %v196 = vcvt.s32.f32 %v189
    %v197 = vmul.f32 %v196, %v194
    %v198 = vxor.u32 %v197, 2147483648
    %v199 = vsel %vm116, %v198, %v197
    %v200 = vsub.s32 4, %v176
    %v201 = vsel %vm116, %v200, %v176
    %v202 = vsel %vm115, %v92, %v199
    %v203 = vsel %vm115, 0, %v201
    %v204 = vcosq.f32.pop %v202
    %v205 = vsinq.f32.pop %v202
    %vm206 = vweird.f32 %v92
    %v207 = vand.u32 %v203, 3
    %vm208 = vcmp.lt.s32.totalorder %v207, 2
    %vm209 = vcmp.eq.s32.totalorder %v207, 0
    %v210 = vxor.u32 %v205, 2147483648
    %v211 = vsel %vm209, %v204, %v210
    %vm212 = vcmp.eq.s32.totalorder %v207, 2
    %v213 = vxor.u32 %v204, 2147483648
    %v214 = vsel %vm212, %v213, %v205
    %v215 = vsel %vm208, %v211, %v214
    %v216 = vsel %vm206, nan, %v215
    %v217 = vand.u32 2147483647, %v93
    %vm218 = vcmp.le.f32.partialorder %v217, 0.7853982
    %vm219 = vcmp.lt.s32.totalorder %v93, 0
    %v220 = vand.u32 %v93, 2139095040
    %v221 = vshrl.u32 %v220, 23
    %v222 = vsub.s32 %v221, 127
    %v223 = vand.u32 2147483647, %v93
    %v224 = vand.u32 %v223, 8388607
    %v225 = vor.u32 %v224, 8388608
    %v226 = vsub.s32 0, %v225
    %v227 = vadd.s32 %v222, 1
    %vm228 = vcmp.gt.s32.totalorder %v227, 0
    %v229 = vsel %vm228, %v227, 0
    %v230 = vshrl.u32 %v229, 5
    %v231 = vand.u32 %v229, 31
    %v232 = vsub.s32 32, %v231
    %v233 = vshrl.u32 683565275, %v232
    %v234 = vshll.u32 683565275, %v231
    %v235 = vshrl.u32 2475754826, %v232
    %v236 = vor.u32 %v234, %v235
    %v237 = vshll.u32 2475754826, %v231
    %v238 = vshrl.u32 2131351028, %v232
    %v239 = vor.u32 %v237, %v238
    %v240 = vshll.u32 2131351028, %v231
    %v241 = vshrl.u32 2102212464, %v232
    %v242 = vor.u32 %v240, %v241
    %v243 = vshll.u32 2102212464, %v231
    %v244 = vshrl.u32 920167782, %v232
    %v245 = vor.u32 %v243, %v244
    %v246 = vshll.u32 920167782, %v231
    %v247 = vshrl.u32 1326507024, %v232
    %v248 = vor.u32 %v246, %v247
    %vm249 = vcmp.lt.s32.totalorder %v230, 1
    %vm250 = vcmp.lt.s32.totalorder %v230, 2
    %vm251 = vcmp.lt.s32.totalorder %v230, 3
    %vm252 = vcmp.lt.s32.totalorder %v230, 4
    %v253 = vsel %vm249, %v233, %v236
    %v254 = vsel %vm252, %v242, 2102212464
    %v255 = vsel %vm251, %v239, %v254
    %v256 = vsel %vm250, %v253, %v255
    %v257 = vsel %vm249, %v236, %v239
    %v258 = vsel %vm252, %v245, 920167782
    %v259 = vsel %vm251, %v242, %v258
    %v260 = vsel %vm250, %v257, %v259
    %v261 = vsel %vm249, %v239, %v242
    %v262 = vsel %vm252, %v248, 1326507024
    %v263 = vsel %vm251, %v245, %v262
    %v264 = vsel %vm250, %v261, %v263
    %v265 = vshll.u32 %v225, 8
    %v266 = vmul.u32.u64.compose %v265, %v264
    %v267 = vextract.low.u32 %v266
    %v268 = vextract.high.u32 %v266
    %v269 = vmul.u32.u64.compose %v265, %v260
    %v270 = vextract.low.u32 %v269
    %v271 = vextract.high.u32 %v269
    %v272 = vmul.u32 %v265, %v256
    %v273 = vadd.s32 %v268, %v270
    %vm274 = vc.u32 %v268, %v270
    %v275 = vadd.s32 %v271, 1
    %v276 = vsel %vm274, %v275, %v271
    %v277 = vadd.s32 %v272, %v276
    %v278 = vadd.s32 %v277, 536870912
    %v279 = vshrl.u32 %v278, 30
    %v280 = vshll.u32 %v279, 30
    %v281 = vsub.s32 %v277, %v280
    %vm282 = vcmp.lt.s32.totalorder %v281, 0
    %v283 = vsub.s32 0, %v281
    %v284 = vsel %vm282, %v283, %v281
    %v285 = vclz %v284
    %v286 = vsub.s32 %v285, 2
    %vm287 = vcmp.gt.s32.totalorder 0, %v286
    %v288 = vsel %vm287, 0, %v286
    %v289 = vsub.s32 32, %v288
    %v290 = vshll.u32 %v281, %v288
    %v291 = vshrl.u32 %v273, %v289
    %v292 = vor.u32 %v290, %v291
    %v293 = vsub.s32 4294967266, %v288
    %v294 = vadd.s32 %v293, 127
    %v295 = vshll.u32 %v294, 23
    %v296 = vor.u32 4788187, %v295
    %v297 = vand.u32 2147483647, %v296
    %v299 = vcvt.s32.f32 %v292
    %v300 = vmul.f32 %v299, %v297
    %v301 = vxor.u32 %v300, 2147483648
    %v302 = vsel %vm219, %v301, %v300
    %v303 = vsub.s32 4, %v279
    %v304 = vsel %vm219, %v303, %v279
    %v305 = vsel %vm218, %v93, %v302
    %v306 = vsel %vm218, 0, %v304
    %v307 = vcosq.f32.pop %v305
    %v308 = vsinq.f32.pop %v305
    %vm309 = vweird.f32 %v93
    %v310 = vand.u32 %v306, 3
    %vm311 = vcmp.lt.s32.totalorder %v310, 2
    %vm312 = vcmp.eq.s32.totalorder %v310, 0
    %v313 = vxor.u32 %v308, 2147483648
    %v314 = vsel %vm312, %v307, %v313
    %vm315 = vcmp.eq.s32.totalorder %v310, 2
    %v316 = vxor.u32 %v307, 2147483648
    %v317 = vsel %vm315, %v316, %v308
    %v318 = vsel %vm311, %v314, %v317
    %v319 = vsel %vm309, nan, %v318
    %v320 = vmul.f32 %v106, %v216
    %v321 = vmul.f32 %v113, %v319
    %322 = vst [vmem:[#allocation11] sm:$0xff] %v320
    %323 = vst [vmem:[#allocation11 + $0x8] sm:$0xff] %v321
    %v324 = vand.u32 2147483647, %v92
    %vm325 = vcmp.le.f32.partialorder %v324, 0.7853982
    %vm326 = vcmp.lt.s32.totalorder %v92, 0
    %v327 = vand.u32 %v92, 2139095040
    %v328 = vshrl.u32 %v327, 23
    %v329 = vsub.s32 %v328, 127
    %v330 = vand.u32 2147483647, %v92
    %v331 = vand.u32 %v330, 8388607
    %v332 = vor.u32 %v331, 8388608
    %v333 = vsub.s32 0, %v332
    %v334 = vadd.s32 %v329, 1
    %vm335 = vcmp.gt.s32.totalorder %v334, 0
    %v336 = vsel %vm335, %v334, 0
    %v337 = vshrl.u32 %v336, 5
    %v338 = vand.u32 %v336, 31
    %v339 = vsub.s32 32, %v338
    %v340 = vshrl.u32 683565275, %v339
    %v341 = vshll.u32 683565275, %v338
    %v342 = vshrl.u32 2475754826, %v339
    %v343 = vor.u32 %v341, %v342
    %v344 = vshll.u32 2475754826, %v338
    %v345 = vshrl.u32 2131351028, %v339
    %v346 = vor.u32 %v344, %v345
    %v347 = vshll.u32 2131351028, %v338
    %v348 = vshrl.u32 2102212464, %v339
    %v349 = vor.u32 %v347, %v348
    %v350 = vshll.u32 2102212464, %v338
    %v351 = vshrl.u32 920167782, %v339
    %v352 = vor.u32 %v350, %v351
    %v353 = vshll.u32 920167782, %v338
    %v354 = vshrl.u32 1326507024, %v339
    %v355 = vor.u32 %v353, %v354
    %vm356 = vcmp.lt.s32.totalorder %v337, 1
    %vm357 = vcmp.lt.s32.totalorder %v337, 2
    %vm358 = vcmp.lt.s32.totalorder %v337, 3
    %vm359 = vcmp.lt.s32.totalorder %v337, 4
    %v360 = vsel %vm356, %v340, %v343
    %v361 = vsel %vm359, %v349, 2102212464
    %v362 = vsel %vm358, %v346, %v361
    %v363 = vsel %vm357, %v360, %v362
    %v364 = vsel %vm356, %v343, %v346
    %v365 = vsel %vm359, %v352, 920167782
    %v366 = vsel %vm358, %v349, %v365
    %v367 = vsel %vm357, %v364, %v366
    %v368 = vsel %vm356, %v346, %v349
    %v369 = vsel %vm359, %v355, 1326507024
    %v370 = vsel %vm358, %v352, %v369
    %v371 = vsel %vm357, %v368, %v370
    %v372 = vshll.u32 %v332, 8
    %v373 = vmul.u32.u64.compose %v372, %v371
    %v374 = vextract.low.u32 %v373
    %v375 = vextract.high.u32 %v373
    %v376 = vmul.u32.u64.compose %v372, %v367
    %v377 = vextract.low.u32 %v376
    %v378 = vextract.high.u32 %v376
    %v379 = vmul.u32 %v372, %v363
    %v380 = vadd.s32 %v375, %v377
    %vm381 = vc.u32 %v375, %v377
    %v382 = vadd.s32 %v378, 1
    %v383 = vsel %vm381, %v382, %v378
    %v384 = vadd.s32 %v379, %v383
    %v385 = vadd.s32 %v384, 536870912
    %v386 = vshrl.u32 %v385, 30
    %v387 = vshll.u32 %v386, 30
    %v388 = vsub.s32 %v384, %v387
    %vm389 = vcmp.lt.s32.totalorder %v388, 0
    %v390 = vsub.s32 0, %v388
    %v391 = vsel %vm389, %v390, %v388
    %v392 = vclz %v391
    %v393 = vsub.s32 %v392, 2
    %vm394 = vcmp.gt.s32.totalorder 0, %v393
    %v395 = vsel %vm394, 0, %v393
    %v396 = vsub.s32 32, %v395
    %v397 = vshll.u32 %v388, %v395
    %v398 = vshrl.u32 %v380, %v396
    %v399 = vor.u32 %v397, %v398
    %v400 = vsub.s32 4294967266, %v395
    %v401 = vadd.s32 %v400, 127
    %v402 = vshll.u32 %v401, 23
    %v403 = vor.u32 4788187, %v402
    %v404 = vand.u32 2147483647, %v403
    %v406 = vcvt.s32.f32 %v399
    %v407 = vmul.f32 %v406, %v404
    %v408 = vxor.u32 %v407, 2147483648
    %v409 = vsel %vm326, %v408, %v407
    %v410 = vsub.s32 4, %v386
    %v411 = vsel %vm326, %v410, %v386
    %v412 = vsel %vm325, %v92, %v409
    %v413 = vsel %vm325, 0, %v411
    %v414 = vcosq.f32.pop %v412
    %v415 = vsinq.f32.pop %v412
    %vm416 = vweird.f32 %v92
    %v417 = vadd.s32 %v413, 3
    %v418 = vand.u32 %v417, 3
    %vm419 = vcmp.lt.s32.totalorder %v418, 2
    %vm420 = vcmp.eq.s32.totalorder %v418, 0
    %v421 = vxor.u32 %v415, 2147483648
    %v422 = vsel %vm420, %v414, %v421
    %vm423 = vcmp.eq.s32.totalorder %v418, 2
    %v424 = vxor.u32 %v414, 2147483648
    %v425 = vsel %vm423, %v424, %v415
    %v426 = vsel %vm419, %v422, %v425
    %v427 = vsel %vm416, nan, %v426
    %v428 = vand.u32 2147483647, %v93
    %vm429 = vcmp.le.f32.partialorder %v428, 0.7853982
    %vm430 = vcmp.lt.s32.totalorder %v93, 0
    %v431 = vand.u32 %v93, 2139095040
    %v432 = vshrl.u32 %v431, 23
    %v433 = vsub.s32 %v432, 127
    %v434 = vand.u32 2147483647, %v93
    %v435 = vand.u32 %v434, 8388607
    %v436 = vor.u32 %v435, 8388608
    %v437 = vsub.s32 0, %v436
    %v438 = vadd.s32 %v433, 1
    %vm439 = vcmp.gt.s32.totalorder %v438, 0
    %v440 = vsel %vm439, %v438, 0
    %v441 = vshrl.u32 %v440, 5
    %v442 = vand.u32 %v440, 31
    %v443 = vsub.s32 32, %v442
    %v444 = vshrl.u32 683565275, %v443
    %v445 = vshll.u32 683565275, %v442
    %v446 = vshrl.u32 2475754826, %v443
    %v447 = vor.u32 %v445, %v446
    %v448 = vshll.u32 2475754826, %v442
    %v449 = vshrl.u32 2131351028, %v443
    %v450 = vor.u32 %v448, %v449
    %v451 = vshll.u32 2131351028, %v442
    %v452 = vshrl.u32 2102212464, %v443
    %v453 = vor.u32 %v451, %v452
    %v454 = vshll.u32 2102212464, %v442
    %v455 = vshrl.u32 920167782, %v443
    %v456 = vor.u32 %v454, %v455
    %v457 = vshll.u32 920167782, %v442
    %v458 = vshrl.u32 1326507024, %v443
    %v459 = vor.u32 %v457, %v458
    %vm460 = vcmp.lt.s32.totalorder %v441, 1
    %vm461 = vcmp.lt.s32.totalorder %v441, 2
    %vm462 = vcmp.lt.s32.totalorder %v441, 3
    %vm463 = vcmp.lt.s32.totalorder %v441, 4
    %v464 = vsel %vm460, %v444, %v447
    %v465 = vsel %vm463, %v453, 2102212464
    %v466 = vsel %vm462, %v450, %v465
    %v467 = vsel %vm461, %v464, %v466
    %v468 = vsel %vm460, %v447, %v450
    %v469 = vsel %vm463, %v456, 920167782
    %v470 = vsel %vm462, %v453, %v469
    %v471 = vsel %vm461, %v468, %v470
    %v472 = vsel %vm460, %v450, %v453
    %v473 = vsel %vm463, %v459, 1326507024
    %v474 = vsel %vm462, %v456, %v473
    %v475 = vsel %vm461, %v472, %v474
    %v476 = vshll.u32 %v436, 8
    %v477 = vmul.u32.u64.compose %v476, %v475
    %v478 = vextract.low.u32 %v477
    %v479 = vextract.high.u32 %v477
    %v480 = vmul.u32.u64.compose %v476, %v471
    %v481 = vextract.low.u32 %v480
    %v482 = vextract.high.u32 %v480
    %v483 = vmul.u32 %v476, %v467
    %v484 = vadd.s32 %v479, %v481
    %vm485 = vc.u32 %v479, %v481
    %v486 = vadd.s32 %v482, 1
    %v487 = vsel %vm485, %v486, %v482
    %v488 = vadd.s32 %v483, %v487
    %v489 = vadd.s32 %v488, 536870912
    %v490 = vshrl.u32 %v489, 30
    %v491 = vshll.u32 %v490, 30
    %v492 = vsub.s32 %v488, %v491
    %vm493 = vcmp.lt.s32.totalorder %v492, 0
    %v494 = vsub.s32 0, %v492
    %v495 = vsel %vm493, %v494, %v492
    %v496 = vclz %v495
    %v497 = vsub.s32 %v496, 2
    %vm498 = vcmp.gt.s32.totalorder 0, %v497
    %v499 = vsel %vm498, 0, %v497
    %v500 = vsub.s32 32, %v499
    %v501 = vshll.u32 %v492, %v499
    %v502 = vshrl.u32 %v484, %v500
    %v503 = vor.u32 %v501, %v502
    %v504 = vsub.s32 4294967266, %v499
    %v505 = vadd.s32 %v504, 127
    %v506 = vshll.u32 %v505, 23
    %v507 = vor.u32 4788187, %v506
    %v508 = vand.u32 2147483647, %v507
    %v510 = vcvt.s32.f32 %v503
    %v511 = vmul.f32 %v510, %v508
    %v512 = vxor.u32 %v511, 2147483648
    %v513 = vsel %vm430, %v512, %v511
    %v514 = vsub.s32 4, %v490
    %v515 = vsel %vm430, %v514, %v490
    %v516 = vsel %vm429, %v93, %v513
    %v517 = vsel %vm429, 0, %v515
    %v518 = vcosq.f32.pop %v516
    %v519 = vsinq.f32.pop %v516
    %vm520 = vweird.f32 %v93
    %v521 = vadd.s32 %v517, 3
    %v522 = vand.u32 %v521, 3
    %vm523 = vcmp.lt.s32.totalorder %v522, 2
    %vm524 = vcmp.eq.s32.totalorder %v522, 0
    %v525 = vxor.u32 %v519, 2147483648
    %v526 = vsel %vm524, %v518, %v525
    %vm527 = vcmp.eq.s32.totalorder %v522, 2
    %v528 = vxor.u32 %v518, 2147483648
    %v529 = vsel %vm527, %v528, %v519
    %v530 = vsel %vm523, %v526, %v529
    %v531 = vsel %vm520, nan, %v530
    %v532 = vmul.f32 %v106, %v427
    %v533 = vmul.f32 %v113, %v531
    %534 = vst [vmem:[#allocation9] sm:$0xff] %v532
    %535 = vst [vmem:[#allocation9 + $0x8] sm:$0xff] %v533
    // Predicated region
    $region26: #{tpu_custom_call.1} parent=1 // pred_check
      _
    $region27: #{tpu_custom_call.1} parent=1 // pred_check_branch
      %537 = sbr.rel (0) target = $region29
    $region28: #{tpu_custom_call.1} parent=1 // pred_region
      %s539 = ssub.s32 256, 256
      %540 = vsyncadd [#allocation4], %s539
      %s541 = sshll.u32 [#allocation8], 4
      %s542 = int_to_ptr.vmem [resolvable:$true] %s541
      %547 = dma.vmem_to_hbm [thread:$0]  %s542, 256, %s3, [#allocation4], 128, 128, 8
    $region29: #{tpu_custom_call.1} parent=1 // pred_fallthru
      _
    // Predicated region
    $region30: #{tpu_custom_call.1} parent=1 // pred_check
      _
    $region31: #{tpu_custom_call.1} parent=1 // pred_check_branch
      %549 = sbr.rel (0) target = $region33
    $region32: #{tpu_custom_call.1} parent=1 // pred_region
      %s551 = ssub.s32 256, 256
      %552 = vsyncadd [#allocation10], %s551
      %s553 = sshll.u32 [#allocation9], 4
      %s554 = int_to_ptr.vmem [resolvable:$true] %s553
      %559 = dma.vmem_to_hbm [thread:$0]  %s554, 256, %s4, [#allocation10], 128, 128, 8
    $region33: #{tpu_custom_call.1} parent=1 // pred_fallthru
      _
    // Predicated region
    $region34: #{tpu_custom_call.1} parent=1 // pred_check
      _
    $region35: #{tpu_custom_call.1} parent=1 // pred_check_branch
      %561 = sbr.rel (0) target = $region37
    $region36: #{tpu_custom_call.1} parent=1 // pred_region
      %s563 = ssub.s32 256, 256
      %564 = vsyncadd [#allocation10], %s563
      %s565 = sshll.u32 [#allocation11], 4
      %s566 = int_to_ptr.vmem [resolvable:$true] %s565
      %571 = dma.vmem_to_hbm [thread:$0]  %s566, 256, %s5, [#allocation10], 128, 128, 8
    $region37: #{tpu_custom_call.1} parent=1 // pred_fallthru
      _
    // Predicated region
    $region38: #{tpu_custom_call.1} parent=1 // pred_check
      _
    $region39: #{tpu_custom_call.1} parent=1 // pred_check_branch
      %573 = sbr.rel (0) target = $region41
    $region40: #{tpu_custom_call.1} parent=1 // pred_region
      %574 = dma.done [#allocation4], 256
    $region41: #{tpu_custom_call.1} parent=1 // pred_fallthru
      _
    // Predicated region
    $region42: #{tpu_custom_call.1} parent=1 // pred_check
      _
    $region43: #{tpu_custom_call.1} parent=1 // pred_check_branch
      %576 = sbr.rel (0) target = $region45
    $region44: #{tpu_custom_call.1} parent=1 // pred_region
      %577 = dma.done [#allocation10], 256
    $region45: #{tpu_custom_call.1} parent=1 // pred_fallthru
      _
    // Predicated region
    $region46: #{tpu_custom_call.1} parent=1 // pred_check
      _
    $region47: #{tpu_custom_call.1} parent=1 // pred_check_branch
      %579 = sbr.rel (0) target = $region49
    $region48: #{tpu_custom_call.1} parent=1 // pred_region
      %580 = dma.done [#allocation10], 256
    $region49: #{tpu_custom_call.1} parent=1 // pred_fallthru
      _
    %581 = vsyncpa [#allocation3], 1
    %582 = vsyncpa [#allocation6], 1
    %583 = vsyncpa [#allocation4], 1
    %584 = vsyncpa [#allocation10], 1

</llo_original>
